<compile_context>
chip_gen: v6e
topology: v6e:2x2x1
jax: 0.10.0
libtpu: 0.0.40
codegen_flags: <defaults>
</compile_context>

<pallas_src>
import functools

import jax
import jax.numpy as jnp
from jax import lax
from jax.experimental import pallas as pl
from jax.experimental.pallas import tpu as pltpu


def _pos_enc_kernel(denom_ref, o_ref, *, stage_len: int, tile_s: int):
    """Fill o_ref (tile_s, d_model) with stage-wise sinusoidal encodings.

    denom_ref: (1, d_model) f32 -> 10000 ** (2*floor(c/2)/d_model)
    """
    rows, d = o_ref.shape
    row0 = pl.program_id(0) * tile_s

    # Per-row position within the stage: (tile_s, 1) integer work only.
    row = row0 + lax.broadcasted_iota(jnp.int32, (rows, 1), 0)
    pos = (row % stage_len).astype(jnp.float32)

    # angle[r, c] = pos[r] / denom[c]  (same formulation as the reference).
    angle = pos / denom_ref[...]

    # Even columns -> sin, odd columns -> cos.
    col = lax.broadcasted_iota(jnp.int32, (1, d), 1)
    is_even = (col % 2) == 0
    o_ref[...] = jnp.where(is_even, jnp.sin(angle), jnp.cos(angle))


def positional_encoding_stagewise(x: jax.Array, max_len: int) -> jax.Array:
    """Returns encoding[:seq_len, :] for x of shape (batch, seq_len, d_model)."""
    NUM_STAGE = 5
    stage_len = int(max_len / NUM_STAGE)
    _, seq_len, d_model = x.shape
    assert seq_len <= stage_len * NUM_STAGE, "seq_len exceeds encoding table length"
    assert d_model % 2 == 0, "d_model must be even (as in the PyTorch module)"

    # Per-column denominator 10000**(2*floor(c/2)/d_model), built exactly like
    # the reference (tiny (1, d_model) array; removes all exp work from kernel).
    col = jnp.arange(d_model, dtype=jnp.int32)
    two_i = ((col // 2) * 2).astype(jnp.float32)
    denom = (jnp.float32(10000.0) ** (two_i / jnp.float32(d_model))).reshape(1, d_model)

    # Row tiling: big enough to amortize grid-step overhead and approach the
    # HBM-write roofline, small enough to stay well under scoped VMEM on all
    # generations (512 * d_model * 4B double-buffered is a few MiB for d<=2k).
    if seq_len <= 512:
        tile_s = seq_len           # full extent -> always satisfies tiling rule
    else:
        tile_s = 512               # multiple of 8; last partial block is padded

    kernel = functools.partial(_pos_enc_kernel, stage_len=stage_len, tile_s=tile_s)
    num_tiles = pl.cdiv(seq_len, tile_s)

    out = pl.pallas_call(
        kernel,
        out_shape=jax.ShapeDtypeStruct((seq_len, d_model), jnp.float32),
        grid=(num_tiles,),
        in_specs=[
            pl.BlockSpec((1, d_model), lambda i: (0, 0)),   # denom
        ],
        out_specs=pl.BlockSpec((tile_s, d_model), lambda i: (i, 0)),
        compiler_params=pltpu.CompilerParams(
            dimension_semantics=("parallel",)),   # row tiles shard across TCs on v7x
    )(denom)
    return out


def _reference(seq_len: int, d_model: int, max_len: int):
    """Pure-JAX reference mirroring the PyTorch __init__ + forward."""
    NUM_STAGE = 5
    L = int(max_len / NUM_STAGE)
    pos = jnp.arange(L, dtype=jnp.float32)[:, None]
    _2i = jnp.arange(0, d_model, 2, dtype=jnp.float32)
    enc = jnp.zeros((L, d_model), jnp.float32)
    enc = enc.at[:, ::2].set(jnp.sin(pos / 10000 ** (_2i / d_model)))
    enc = enc.at[:, 1::2].set(jnp.cos(pos / 10000 ** (_2i / d_model)))
    enc = jnp.concatenate([enc] * NUM_STAGE, axis=0)
    return enc[:seq_len, :]


if __name__ == "__main__":
    key = jax.random.PRNGKey(0)
    batch, seq_len, d_model = 2, 8, 32
    max_len = 40  # -> per-stage length L = 8, full table length 40

    x = jax.random.normal(key, (batch, seq_len, d_model), dtype=jnp.float32)

    out = positional_encoding_stagewise(x, max_len)
    out = jax.block_until_ready(out)

    ref = _reference(seq_len, d_model, max_len)
    assert out.shape == (seq_len, d_model)
    assert out.dtype == jnp.float32
    assert jnp.allclose(out, ref, atol=1e-4, rtol=1e-4), "mismatch vs reference"

    # Also check a multi-tile / multi-stage configuration (2 row tiles, last one
    # partial; positions wrap around the stage length twice).
    seq_len2, d_model2, max_len2 = 600, 128, 1500   # L = 300, tiles of 512
    x2 = jax.random.normal(key, (1, seq_len2, d_model2), dtype=jnp.float32)
    out2 = jax.block_until_ready(positional_encoding_stagewise(x2, max_len2))
    ref2 = _reference(seq_len2, d_model2, max_len2)
    assert jnp.allclose(out2, ref2, atol=1e-4, rtol=1e-4), "mismatch vs reference (tiled)"

    print("KERNEL_OK")
</pallas_src>

<mosaic_0001>
module attributes {stable_mosaic.version = 11 : i64} {
  func.func @_pos_enc_kernel(%arg0: i32, %arg1: memref<1x32xf32, #tpu.memory_space<vmem>>, %arg2: memref<8x32xf32, #tpu.memory_space<vmem>>) attributes {dimension_semantics = [#tpu.dimension_semantics<parallel>], iteration_bounds = array<i64: 1>, scalar_prefetch = 0 : i64, scratch_operands = 0 : i64, tpu.core_type = #tpu.core_type<tc>, window_params = [{pipeline_mode = #tpu.pipeline_mode<synchronous>, transform_indices = @transform_0, window_bounds = array<i64: 1, 32>}, {transform_indices = @transform_1, window_bounds = array<i64: 8, 32>}]} {
    %c8_i32 = arith.constant 8 : i32
    %0 = arith.muli %arg0, %c8_i32 : i32
    %1 = tpu.iota {dimensions = array<i32: 0>} : vector<8x1xi32>
    %2 = vector.broadcast %0 : i32 to vector<8x1xi32>
    %3 = arith.addi %2, %1 : vector<8x1xi32>
    %c8_i32_0 = arith.constant 8 : i32
    %c0_i32 = arith.constant 0 : i32
    %4 = arith.cmpi eq, %c8_i32_0, %c0_i32 : i32
    %c1_i32 = arith.constant 1 : i32
    %5 = arith.select %4, %c1_i32, %c8_i32_0 : i32
    %6 = vector.broadcast %5 : i32 to vector<8x1xi32>
    %7 = arith.remsi %3, %6 : vector<8x1xi32>
    %c0_i32_1 = arith.constant 0 : i32
    %8 = vector.broadcast %c0_i32_1 : i32 to vector<8x1xi32>
    %9 = arith.cmpi ne, %7, %8 : vector<8x1xi32>
    %c0_i32_2 = arith.constant 0 : i32
    %10 = vector.broadcast %c0_i32_2 : i32 to vector<8x1xi32>
    %11 = arith.cmpi slt, %7, %10 : vector<8x1xi32>
    %c0_i32_3 = arith.constant 0 : i32
    %12 = arith.cmpi slt, %5, %c0_i32_3 : i32
    %13 = vector.broadcast %12 : i1 to vector<8x1xi1>
    %14 = vector.broadcast %13 : vector<8x1xi1> to vector<8x1xi1>
    %15 = arith.xori %11, %14 : vector<8x1xi1>
    %16 = arith.andi %15, %9 : vector<8x1xi1>
    %17 = vector.broadcast %5 : i32 to vector<8x1xi32>
    %18 = arith.addi %7, %17 : vector<8x1xi32>
    %19 = arith.select %16, %18, %7 : vector<8x1xi1>, vector<8x1xi32>
    %20 = arith.sitofp %19 : vector<8x1xi32> to vector<8x1xf32>
    %c0 = arith.constant 0 : index
    %c0_4 = arith.constant 0 : index
    %21 = vector.load %arg1[%c0, %c0_4] : memref<1x32xf32, #tpu.memory_space<vmem>>, vector<1x32xf32>
    %22 = vector.broadcast %20 : vector<8x1xf32> to vector<8x32xf32>
    %23 = vector.broadcast %21 : vector<1x32xf32> to vector<8x32xf32>
    %24 = arith.divf %22, %23 : vector<8x32xf32>
    %25 = tpu.iota {dimensions = array<i32: 1>} : vector<1x32xi32>
    %c2_i32 = arith.constant 2 : i32
    %c0_i32_5 = arith.constant 0 : i32
    %26 = arith.cmpi eq, %c2_i32, %c0_i32_5 : i32
    %c1_i32_6 = arith.constant 1 : i32
    %27 = arith.select %26, %c1_i32_6, %c2_i32 : i32
    %28 = vector.broadcast %27 : i32 to vector<1x32xi32>
    %29 = arith.remsi %25, %28 : vector<1x32xi32>
    %c0_i32_7 = arith.constant 0 : i32
    %30 = vector.broadcast %c0_i32_7 : i32 to vector<1x32xi32>
    %31 = arith.cmpi ne, %29, %30 : vector<1x32xi32>
    %c0_i32_8 = arith.constant 0 : i32
    %32 = vector.broadcast %c0_i32_8 : i32 to vector<1x32xi32>
    %33 = arith.cmpi slt, %29, %32 : vector<1x32xi32>
    %c0_i32_9 = arith.constant 0 : i32
    %34 = arith.cmpi slt, %27, %c0_i32_9 : i32
    %35 = vector.broadcast %34 : i1 to vector<1x32xi1>
    %36 = vector.broadcast %35 : vector<1x32xi1> to vector<1x32xi1>
    %37 = arith.xori %33, %36 : vector<1x32xi1>
    %38 = arith.andi %37, %31 : vector<1x32xi1>
    %39 = vector.broadcast %27 : i32 to vector<1x32xi32>
    %40 = arith.addi %29, %39 : vector<1x32xi32>
    %41 = arith.select %38, %40, %29 : vector<1x32xi1>, vector<1x32xi32>
    %c0_i32_10 = arith.constant 0 : i32
    %42 = vector.broadcast %c0_i32_10 : i32 to vector<1x32xi32>
    %43 = arith.cmpi eq, %41, %42 : vector<1x32xi32>
    %44 = math.sin %24 : vector<8x32xf32>
    %45 = math.cos %24 : vector<8x32xf32>
    %46 = vector.shape_cast %43 : vector<1x32xi1> to vector<1x32xi1>
    %47 = vector.broadcast %46 : vector<1x32xi1> to vector<8x32xi1>
    %48 = arith.select %47, %44, %45 : vector<8x32xi1>, vector<8x32xf32>
    %c0_11 = arith.constant 0 : index
    %c0_12 = arith.constant 0 : index
    %49 = vector.load %arg2[%c0_11, %c0_12] : memref<8x32xf32, #tpu.memory_space<vmem>>, vector<8x32xf32>
    tpu.vector_store %arg2[%c0_11, %c0_12], %48 {strides = array<i32>} : memref<8x32xf32, #tpu.memory_space<vmem>>, vector<8x32xf32>,
    return
  }
  func.func @transform_0(%arg0: i32) -> (i32, i32) {
    %c0_i32 = arith.constant 0 : i32
    %c0_i32_0 = arith.constant 0 : i32
    %c0_i32_1 = arith.constant 0 : i32
    return %c0_i32, %c0_i32_0 : i32, i32
  }
  func.func @transform_1(%arg0: i32) -> (i32, i32) {
    %c0_i32 = arith.constant 0 : i32
    %c0_i32_0 = arith.constant 0 : i32
    return %arg0, %c0_i32 : i32, i32
  }
}

</mosaic_0001>

<llo_original>
// kernel: tpu_custom_call.1
$region0: #{tpu_custom_call.1}
  #allocation0 [shape = 'u32[]', space=smem, size = 0x4, offset = 0x4, fixed_abs, tag = 'smem constant byte address 0x4 - core index']
  #allocation1 [shape = 'u32[144,128]{1,0:T(1,128)}', space=vmem, size = 0x12000, scoped, tag = 'internal scratch']
  %s0 = inlined_call_operand.hbm [shape: f32[1,32], index: 0, kind: input, shape index: {}]
  %s1 = inlined_call_operand.hbm [shape: f32[8,32], index: 1, kind: output, shape index: {}]
  %s2 = sld [smem:[#allocation0]]
  $region18: #{tpu_custom_call.1} parent=0
    _
  %s4 = ssub.s32 1, %s2
  %s5 = scalar_select 0, %s4, %s2
  $region1: #{tpu_custom_call.1} parent=0
    #allocation2 [shape = 'u8[512]{0}', space=vmem, size = 0x400, scoped, tag = 'input window, operand 0, single buffered']
    #allocation3 [shape = 's32[1]{0}', space=sflag, size = 0x4, scoped, tag = 'scoped memory for tpu_custom_call.1']
    #allocation4 [shape = 's32[1]{0}', space=sflag, size = 0x4, scoped, tag = 'scoped memory for tpu_custom_call.1']
    #allocation5 [shape = 'u8[4096]{0}', space=vmem, size = 0x1000, scoped, tag = 'output window, operand 0, single buffered']
    %6 = vsyncpa [#allocation3], 0
    %7 = vsyncpa [#allocation4], 0
    // Predicated region
    $region2: #{tpu_custom_call.1} parent=1 // pred_check
      _
    $region3: #{tpu_custom_call.1} parent=1 // pred_check_branch
      %9 = sbr.rel (0) target = $region5
    $region4: #{tpu_custom_call.1} parent=1 // pred_region
      %s11 = ssub.s32 16, 16
      %12 = vsyncadd [#allocation3], %s11
      %s14 = sshll.u32 [#allocation2], 4
      %s15 = int_to_ptr.vmem [resolvable:$true] %s14
      %17 = dma.hbm_to_vmem [thread:$0]  %s0, 16, %s15, [#allocation3]
    $region5: #{tpu_custom_call.1} parent=1 // pred_fallthru
      _
    // Predicated region
    $region6: #{tpu_custom_call.1} parent=1 // pred_check
      _
    $region7: #{tpu_custom_call.1} parent=1 // pred_check_branch
      %19 = sbr.rel (0) target = $region9
    $region8: #{tpu_custom_call.1} parent=1 // pred_region
      %20 = dma.done [#allocation3], 16
    $region9: #{tpu_custom_call.1} parent=1 // pred_fallthru
      _
    %s21 = smul.u32 0, 8
    %v22 = vlaneseq
    %v23 = vshrl.u32 %v22, 7
    %v24 = vstv %s21
    %v25 = vadd.s32 %v24, %v23
    %vm26 = vcmp.lt.s32.totalorder %v25, 0
    %v27 = vsub.s32 0, %v25
    %v28 = vsel %vm26, %v27, %v25
    %v29 = vshrl.u32 %v28, 3
    %v30 = vand.u32 %v28, 7
    %v31 = vsub.s32 0, %v30
    %v32 = vsel %vm26, %v31, %v30
    %vm33 = vcmp.ne.s32.totalorder %v32, 0
    %vm34 = vcmp.lt.s32.totalorder %v32, 0
    %vm35 = vmand %vm34, %vm33
    %v36 = vadd.s32 %v32, 8
    %v37 = vsel %vm35, %v36, %v32
    %v38 = vcvt.s32.f32 %v37
    %v39 = vld [vmem:[#allocation2] sm:$0x1]
    %v41 = vlaneseq
    %v42 = vshrl.u32 %v41, 7
    %v43 = vsub.s32 0, %v42
    %v44 = vrot.slane %v39, %v43
    %v46 = vrcp.pop %v44
    %v47 = vmul.f32 %v38, %v46
    %v48 = vlaneseq
    %v49 = vand.u32 %v48, 127
    %vm50 = vcmp.lt.s32.totalorder %v49, 0
    %v51 = vsub.s32 0, %v49
    %v52 = vsel %vm50, %v51, %v49
    %v53 = vshrl.u32 %v52, 1
    %v54 = vand.u32 %v52, 1
    %v55 = vsub.s32 0, %v54
    %v56 = vsel %vm50, %v55, %v54
    %vm57 = vcmp.ne.s32.totalorder %v56, 0
    %vm58 = vcmp.lt.s32.totalorder %v56, 0
    %vm59 = vmand %vm58, %vm57
    %v60 = vadd.s32 %v56, 2
    %v61 = vsel %vm59, %v60, %v56
    %vm62 = vcmp.eq.s32.totalorder %v61, 0
    %v63 = vand.u32 2147483647, %v47
    %vm64 = vcmp.le.f32.partialorder %v63, 0.7853982
    %vm65 = vcmp.lt.s32.totalorder %v47, 0
    %v66 = vand.u32 %v47, 2139095040
    %v67 = vshrl.u32 %v66, 23
    %v68 = vsub.s32 %v67, 127
    %v69 = vand.u32 2147483647, %v47
    %v70 = vand.u32 %v69, 8388607
    %v71 = vor.u32 %v70, 8388608
    %v72 = vsub.s32 0, %v71
    %v73 = vadd.s32 %v68, 1
    %vm74 = vcmp.gt.s32.totalorder %v73, 0
    %v75 = vsel %vm74, %v73, 0
    %v76 = vshrl.u32 %v75, 5
    %v77 = vand.u32 %v75, 31
    %v78 = vsub.s32 32, %v77
    %v79 = vshrl.u32 683565275, %v78
    %v80 = vshll.u32 683565275, %v77
    %v81 = vshrl.u32 2475754826, %v78
    %v82 = vor.u32 %v80, %v81
    %v83 = vshll.u32 2475754826, %v77
    %v84 = vshrl.u32 2131351028, %v78
    %v85 = vor.u32 %v83, %v84
    %v86 = vshll.u32 2131351028, %v77
    %v87 = vshrl.u32 2102212464, %v78
    %v88 = vor.u32 %v86, %v87
    %v89 = vshll.u32 2102212464, %v77
    %v90 = vshrl.u32 920167782, %v78
    %v91 = vor.u32 %v89, %v90
    %v92 = vshll.u32 920167782, %v77
    %v93 = vshrl.u32 1326507024, %v78
    %v94 = vor.u32 %v92, %v93
    %vm95 = vcmp.lt.s32.totalorder %v76, 1
    %vm96 = vcmp.lt.s32.totalorder %v76, 2
    %vm97 = vcmp.lt.s32.totalorder %v76, 3
    %vm98 = vcmp.lt.s32.totalorder %v76, 4
    %v99 = vsel %vm95, %v79, %v82
    %v100 = vsel %vm98, %v88, 2102212464
    %v101 = vsel %vm97, %v85, %v100
    %v102 = vsel %vm96, %v99, %v101
    %v103 = vsel %vm95, %v82, %v85
    %v104 = vsel %vm98, %v91, 920167782
    %v105 = vsel %vm97, %v88, %v104
    %v106 = vsel %vm96, %v103, %v105
    %v107 = vsel %vm95, %v85, %v88
    %v108 = vsel %vm98, %v94, 1326507024
    %v109 = vsel %vm97, %v91, %v108
    %v110 = vsel %vm96, %v107, %v109
    %v111 = vshll.u32 %v71, 8
    %v112 = vmul.u32.u64.compose %v111, %v110
    %v113 = vextract.low.u32 %v112
    %v114 = vextract.high.u32 %v112
    %v115 = vmul.u32.u64.compose %v111, %v106
    %v116 = vextract.low.u32 %v115
    %v117 = vextract.high.u32 %v115
    %v118 = vmul.u32 %v111, %v102
    %v119 = vadd.s32 %v114, %v116
    %vm120 = vc.u32 %v114, %v116
    %v121 = vadd.s32 %v117, 1
    %v122 = vsel %vm120, %v121, %v117
    %v123 = vadd.s32 %v118, %v122
    %v124 = vadd.s32 %v123, 536870912
    %v125 = vshrl.u32 %v124, 30
    %v126 = vshll.u32 %v125, 30
    %v127 = vsub.s32 %v123, %v126
    %vm128 = vcmp.lt.s32.totalorder %v127, 0
    %v129 = vsub.s32 0, %v127
    %v130 = vsel %vm128, %v129, %v127
    %v131 = vclz %v130
    %v132 = vsub.s32 %v131, 2
    %vm133 = vcmp.gt.s32.totalorder 0, %v132
    %v134 = vsel %vm133, 0, %v132
    %v135 = vsub.s32 32, %v134
    %v136 = vshll.u32 %v127, %v134
    %v137 = vshrl.u32 %v119, %v135
    %v138 = vor.u32 %v136, %v137
    %v139 = vsub.s32 4294967266, %v134
    %v140 = vadd.s32 %v139, 127
    %v141 = vshll.u32 %v140, 23
    %v142 = vor.u32 4788187, %v141
    %v143 = vand.u32 2147483647, %v142
    %v145 = vcvt.s32.f32 %v138
    %v146 = vmul.f32 %v145, %v143
    %v147 = vxor.u32 %v146, 2147483648
    %v148 = vsel %vm65, %v147, %v146
    %v149 = vsub.s32 4, %v125
    %v150 = vsel %vm65, %v149, %v125
    %v151 = vsel %vm64, %v47, %v148
    %v152 = vsel %vm64, 0, %v150
    %v153 = vcosq.f32.pop %v151
    %v154 = vsinq.f32.pop %v151
    %vm155 = vweird.f32 %v47
    %v156 = vadd.s32 %v152, 3
    %v157 = vand.u32 %v156, 3
    %vm158 = vcmp.lt.s32.totalorder %v157, 2
    %vm159 = vcmp.eq.s32.totalorder %v157, 0
    %v160 = vxor.u32 %v154, 2147483648
    %v161 = vsel %vm159, %v153, %v160
    %vm162 = vcmp.eq.s32.totalorder %v157, 2
    %v163 = vxor.u32 %v153, 2147483648
    %v164 = vsel %vm162, %v163, %v154
    %v165 = vsel %vm158, %v161, %v164
    %v166 = vsel %vm155, nan, %v165
    %v167 = vand.u32 2147483647, %v47
    %vm168 = vcmp.le.f32.partialorder %v167, 0.7853982
    %vm169 = vcmp.lt.s32.totalorder %v47, 0
    %v170 = vand.u32 %v47, 2139095040
    %v171 = vshrl.u32 %v170, 23
    %v172 = vsub.s32 %v171, 127
    %v173 = vand.u32 2147483647, %v47
    %v174 = vand.u32 %v173, 8388607
    %v175 = vor.u32 %v174, 8388608
    %v176 = vsub.s32 0, %v175
    %v177 = vadd.s32 %v172, 1
    %vm178 = vcmp.gt.s32.totalorder %v177, 0
    %v179 = vsel %vm178, %v177, 0
    %v180 = vshrl.u32 %v179, 5
    %v181 = vand.u32 %v179, 31
    %v182 = vsub.s32 32, %v181
    %v183 = vshrl.u32 683565275, %v182
    %v184 = vshll.u32 683565275, %v181
    %v185 = vshrl.u32 2475754826, %v182
    %v186 = vor.u32 %v184, %v185
    %v187 = vshll.u32 2475754826, %v181
    %v188 = vshrl.u32 2131351028, %v182
    %v189 = vor.u32 %v187, %v188
    %v190 = vshll.u32 2131351028, %v181
    %v191 = vshrl.u32 2102212464, %v182
    %v192 = vor.u32 %v190, %v191
    %v193 = vshll.u32 2102212464, %v181
    %v194 = vshrl.u32 920167782, %v182
    %v195 = vor.u32 %v193, %v194
    %v196 = vshll.u32 920167782, %v181
    %v197 = vshrl.u32 1326507024, %v182
    %v198 = vor.u32 %v196, %v197
    %vm199 = vcmp.lt.s32.totalorder %v180, 1
    %vm200 = vcmp.lt.s32.totalorder %v180, 2
    %vm201 = vcmp.lt.s32.totalorder %v180, 3
    %vm202 = vcmp.lt.s32.totalorder %v180, 4
    %v203 = vsel %vm199, %v183, %v186
    %v204 = vsel %vm202, %v192, 2102212464
    %v205 = vsel %vm201, %v189, %v204
    %v206 = vsel %vm200, %v203, %v205
    %v207 = vsel %vm199, %v186, %v189
    %v208 = vsel %vm202, %v195, 920167782
    %v209 = vsel %vm201, %v192, %v208
    %v210 = vsel %vm200, %v207, %v209
    %v211 = vsel %vm199, %v189, %v192
    %v212 = vsel %vm202, %v198, 1326507024
    %v213 = vsel %vm201, %v195, %v212
    %v214 = vsel %vm200, %v211, %v213
    %v215 = vshll.u32 %v175, 8
    %v216 = vmul.u32.u64.compose %v215, %v214
    %v217 = vextract.low.u32 %v216
    %v218 = vextract.high.u32 %v216
    %v219 = vmul.u32.u64.compose %v215, %v210
    %v220 = vextract.low.u32 %v219
    %v221 = vextract.high.u32 %v219
    %v222 = vmul.u32 %v215, %v206
    %v223 = vadd.s32 %v218, %v220
    %vm224 = vc.u32 %v218, %v220
    %v225 = vadd.s32 %v221, 1
    %v226 = vsel %vm224, %v225, %v221
    %v227 = vadd.s32 %v222, %v226
    %v228 = vadd.s32 %v227, 536870912
    %v229 = vshrl.u32 %v228, 30
    %v230 = vshll.u32 %v229, 30
    %v231 = vsub.s32 %v227, %v230
    %vm232 = vcmp.lt.s32.totalorder %v231, 0
    %v233 = vsub.s32 0, %v231
    %v234 = vsel %vm232, %v233, %v231
    %v235 = vclz %v234
    %v236 = vsub.s32 %v235, 2
    %vm237 = vcmp.gt.s32.totalorder 0, %v236
    %v238 = vsel %vm237, 0, %v236
    %v239 = vsub.s32 32, %v238
    %v240 = vshll.u32 %v231, %v238
    %v241 = vshrl.u32 %v223, %v239
    %v242 = vor.u32 %v240, %v241
    %v243 = vsub.s32 4294967266, %v238
    %v244 = vadd.s32 %v243, 127
    %v245 = vshll.u32 %v244, 23
    %v246 = vor.u32 4788187, %v245
    %v247 = vand.u32 2147483647, %v246
    %v249 = vcvt.s32.f32 %v242
    %v250 = vmul.f32 %v249, %v247
    %v251 = vxor.u32 %v250, 2147483648
    %v252 = vsel %vm169, %v251, %v250
    %v253 = vsub.s32 4, %v229
    %v254 = vsel %vm169, %v253, %v229
    %v255 = vsel %vm168, %v47, %v252
    %v256 = vsel %vm168, 0, %v254
    %v257 = vcosq.f32.pop %v255
    %v258 = vsinq.f32.pop %v255
    %vm259 = vweird.f32 %v47
    %v260 = vand.u32 %v256, 3
    %vm261 = vcmp.lt.s32.totalorder %v260, 2
    %vm262 = vcmp.eq.s32.totalorder %v260, 0
    %v263 = vxor.u32 %v258, 2147483648
    %v264 = vsel %vm262, %v257, %v263
    %vm265 = vcmp.eq.s32.totalorder %v260, 2
    %v266 = vxor.u32 %v257, 2147483648
    %v267 = vsel %vm265, %v266, %v258
    %v268 = vsel %vm261, %v264, %v267
    %v269 = vsel %vm259, nan, %v268
    %v270 = vsel %vm62, 1, 0
    %vm271 = vcmp.eq.s32.totalorder %v270, 1
    %v272 = vsel %vm271, %v166, %v269
    %vm273 = vcmask 261120
    %274 = vst.msk [vmem:[#allocation5] sm:$0xff] %vm273, %v272
    // Predicated region
    $region10: #{tpu_custom_call.1} parent=1 // pred_check
      _
    $region11: #{tpu_custom_call.1} parent=1 // pred_check_branch
      %276 = sbr.rel (0) target = $region13
    $region12: #{tpu_custom_call.1} parent=1 // pred_region
      %s278 = ssub.s32 128, 128
      %279 = vsyncadd [#allocation4], %s278
      %s281 = sshll.u32 [#allocation5], 4
      %s282 = int_to_ptr.vmem [resolvable:$true] %s281
      %284 = dma.vmem_to_hbm [thread:$0]  %s282, 128, %s1, [#allocation4]
    $region13: #{tpu_custom_call.1} parent=1 // pred_fallthru
      _
    // Predicated region
    $region14: #{tpu_custom_call.1} parent=1 // pred_check
      _
    $region15: #{tpu_custom_call.1} parent=1 // pred_check_branch
      %286 = sbr.rel (0) target = $region17
    $region16: #{tpu_custom_call.1} parent=1 // pred_region
      %287 = dma.done [#allocation4], 128
    $region17: #{tpu_custom_call.1} parent=1 // pred_fallthru
      _
    %288 = vsyncpa [#allocation3], 1
    %289 = vsyncpa [#allocation4], 1

</llo_original>
